<compile_context>
chip_gen: v7x
topology: tpu7x:2x2x1
jax: 0.10.0
libtpu: 0.0.40
codegen_flags: <defaults>
</compile_context>

<pallas_src>
import functools

import jax
import jax.numpy as jnp
from jax.experimental import pallas as pl
from jax.experimental.pallas import tpu as pltpu


def _ce_dice_partial_kernel(x_ref, y_ref, ce_ref, inter_ref, xsum_ref, ysum_ref,
                            *, true_t: int):
    """Accumulate per-batch partial sums over the t (lane) axis.

    x_ref:     (1, C, TILE_T) logits (native dtype, upcast here)
    y_ref:     (1, 1, TILE_T) int32 labels
    ce_ref:    (1, 1, 1)  running sum over t of (logsumexp_c(x) - x[target])
    inter_ref: (1, C, 1)  running sum over t of x * onehot(y)
    xsum_ref:  (1, C, 1)  running sum over t of x
    ysum_ref:  (1, C, 1)  running sum over t of onehot(y)
    """
    t = pl.program_id(1)

    @pl.when(t == 0)
    def _init():
        ce_ref[...] = jnp.zeros_like(ce_ref)
        inter_ref[...] = jnp.zeros_like(inter_ref)
        xsum_ref[...] = jnp.zeros_like(xsum_ref)
        ysum_ref[...] = jnp.zeros_like(ysum_ref)

    x = x_ref[...].astype(jnp.float32)                     # (1, C, TT)
    y = y_ref[...]                                         # (1, 1, TT) int32
    _, C, TT = x.shape

    # Mask the (possibly padded) tail tile.
    lane = jax.lax.broadcasted_iota(jnp.int32, (1, 1, TT), 2)
    valid = (t * TT + lane) < true_t                       # (1, 1, TT) bool
    validf = valid.astype(jnp.float32)
    x = jnp.where(valid, x, 0.0)                           # zero padded lanes (bcast over C)

    # One-hot as a compare; px = x at the target class (reused for CE tgt and Dice inter).
    cls_iota = jax.lax.broadcasted_iota(jnp.int32, (1, C, TT), 1)
    match = jnp.logical_and(cls_iota == y, valid)          # (1, C, TT)
    px = jnp.where(match, x, 0.0)                          # (1, C, TT)

    # ---- Cross-entropy partial: sum_t (logsumexp_c(x) - x[target]) ----
    m = jnp.max(x, axis=1, keepdims=True)                  # (1, 1, TT) sublane reduce
    lse = jnp.log(jnp.sum(jnp.exp(x - m), axis=1, keepdims=True)) + m
    tgt = jnp.sum(px, axis=1, keepdims=True)               # (1, 1, TT)
    ce_ref[...] += jnp.sum((lse - tgt) * validf, axis=2, keepdims=True)

    # ---- Dice partials on raw logits (as in the reference): sums over t = lane reduces ----
    inter_ref[...] += jnp.sum(px, axis=2, keepdims=True)
    xsum_ref[...] += jnp.sum(x, axis=2, keepdims=True)
    ysum_ref[...] += jnp.sum(match.astype(jnp.float32), axis=2, keepdims=True)


def _choose_tile_t(c: int, t: int, itemsize: int) -> int:
    """Lane-aligned T tile sized so a double-buffered x tile stays small on v5e/v7x."""
    if t <= 256:
        return t                                  # full-dim block (no (8,128) constraint)
    budget_bytes = 2 * 1024 * 1024                # ~2 MiB per x buffer (x2 for double-buffer)
    tile = budget_bytes // max(1, c * itemsize)
    tile = max(128, min(tile, 8192))
    tile = (tile // 128) * 128
    return t if tile >= t else tile


def cross_entropy_dice_loss_1d(x_bct, y_bt, *, lam: float = 0.05, eps: float = 1e-8):
    """x_bct: (B, C, T) logits (any float dtype). y_bt: (B, T) integer labels. Scalar loss."""
    B, C, T = x_bct.shape
    y3 = y_bt.astype(jnp.int32).reshape(B, 1, T)           # metadata-only reshape, no transpose
    tile_t = _choose_tile_t(C, T, jnp.dtype(x_bct.dtype).itemsize)
    nt = pl.cdiv(T, tile_t)

    kernel = functools.partial(_ce_dice_partial_kernel, true_t=T)
    ce_b, inter_b, xsum_b, ysum_b = pl.pallas_call(
        kernel,
        out_shape=(
            jax.ShapeDtypeStruct((B, 1, 1), jnp.float32),
            jax.ShapeDtypeStruct((B, C, 1), jnp.float32),
            jax.ShapeDtypeStruct((B, C, 1), jnp.float32),
            jax.ShapeDtypeStruct((B, C, 1), jnp.float32),
        ),
        grid_spec=pltpu.PrefetchScalarGridSpec(
            num_scalar_prefetch=0,
            grid=(B, nt),                                   # B parallel, T reduction last
            in_specs=[
                pl.BlockSpec((1, C, tile_t), lambda b, t: (b, 0, t)),
                pl.BlockSpec((1, 1, tile_t), lambda b, t: (b, 0, t)),
            ],
            out_specs=[
                pl.BlockSpec((1, 1, 1), lambda b, t: (b, 0, 0)),
                pl.BlockSpec((1, C, 1), lambda b, t: (b, 0, 0)),
                pl.BlockSpec((1, C, 1), lambda b, t: (b, 0, 0)),
                pl.BlockSpec((1, C, 1), lambda b, t: (b, 0, 0)),
            ],
        ),
        compiler_params=pltpu.CompilerParams(
            dimension_semantics=("parallel", "arbitrary")),
    )(x_bct, y3)

    # Tiny epilogue on B and B*C scalars (negligible) — combine partials into the loss.
    ce_mean = jnp.sum(ce_b) / float(B * T)
    inter = inter_b[:, 1:, 0]                               # ignore class 0
    denom = xsum_b[:, 1:, 0] + ysum_b[:, 1:, 0] + eps
    dsc = 2.0 * inter / denom
    dice = 1.0 - jnp.mean(dsc)
    return lam * ce_mean + (1.0 - lam) * dice


def _reference(x_bct, y_bt, *, lam: float = 0.05, eps: float = 1e-8):
    """Pure-JAX reference mirroring the PyTorch module."""
    x = jnp.transpose(x_bct, (0, 2, 1)).astype(jnp.float32)   # (B, T, C)
    B, T, C = x.shape
    onehot = jax.nn.one_hot(y_bt, C, dtype=jnp.float32)
    logp = jax.nn.log_softmax(x, axis=-1)
    ce = -jnp.mean(jnp.sum(logp * onehot, axis=-1))
    xd, yd = x[..., 1:], onehot[..., 1:]
    dsc = 2.0 * jnp.sum(xd * yd, axis=1) / (jnp.sum(xd, axis=1) + jnp.sum(yd, axis=1) + eps)
    dice = 1.0 - jnp.mean(dsc)
    return lam * ce + (1.0 - lam) * dice


if __name__ == "__main__":
    # Shapes implied by the module: logits (batch, class, t), labels (batch, t).
    B, C, T = 2, 4, 16
    key = jax.random.PRNGKey(0)
    kx, ky = jax.random.split(key)
    x = jax.random.normal(kx, (B, C, T), dtype=jnp.float32)
    y = jax.random.randint(ky, (B, T), 0, C, dtype=jnp.int32)

    loss = jax.block_until_ready(cross_entropy_dice_loss_1d(x, y, lam=0.05, eps=1e-8))
    ref = jax.block_until_ready(_reference(x, y, lam=0.05, eps=1e-8))
    assert jnp.allclose(loss, ref, rtol=1e-5, atol=1e-5), (loss, ref)

    print("KERNEL_OK")
</pallas_src>

<mosaic_0001>
module attributes {stable_mosaic.version = 11 : i64} {
  func.func @_ce_dice_partial_kernel(%arg0: i32, %arg1: i32, %arg2: memref<1x4x16xf32, #tpu.memory_space<vmem>>, %arg3: memref<1x1x16xi32, #tpu.memory_space<vmem>>, %arg4: memref<1x1x1xf32, #tpu.memory_space<vmem>>, %arg5: memref<1x4x1xf32, #tpu.memory_space<vmem>>, %arg6: memref<1x4x1xf32, #tpu.memory_space<vmem>>, %arg7: memref<1x4x1xf32, #tpu.memory_space<vmem>>) attributes {dimension_semantics = [#tpu.dimension_semantics<parallel>, #tpu.dimension_semantics<arbitrary>], iteration_bounds = array<i64: 2, 1>, scalar_prefetch = 0 : i64, scratch_operands = 0 : i64, tpu.core_type = #tpu.core_type<tc>, window_params = [{transform_indices = @transform_0, window_bounds = array<i64: 1, 4, 16>}, {transform_indices = @transform_1, window_bounds = array<i64: 1, 1, 16>}, {transform_indices = @transform_2, window_bounds = array<i64: 1, 1, 1>}, {transform_indices = @transform_3, window_bounds = array<i64: 1, 4, 1>}, {transform_indices = @transform_4, window_bounds = array<i64: 1, 4, 1>}, {transform_indices = @transform_5, window_bounds = array<i64: 1, 4, 1>}]} {
    %c0_i32 = arith.constant 0 : i32
    %0 = arith.cmpi eq, %arg1, %c0_i32 : i32
    %1 = arith.extui %0 : i1 to i32
    %c0_i32_0 = arith.constant 0 : i32
    %2 = arith.cmpi ne, %1, %c0_i32_0 : i32
    scf.if %2 {
      %cst_39 = arith.constant 0.000000e+00 : f32
      %59 = vector.broadcast %cst_39 : f32 to vector<1x1x1xf32>
      %c0_40 = arith.constant 0 : index
      %c0_41 = arith.constant 0 : index
      %c0_42 = arith.constant 0 : index
      %60 = vector.load %arg4[%c0_40, %c0_41, %c0_42] : memref<1x1x1xf32, #tpu.memory_space<vmem>>, vector<1x1x1xf32>
      tpu.vector_store %arg4[%c0_40, %c0_41, %c0_42], %59 {strides = array<i32>} : memref<1x1x1xf32, #tpu.memory_space<vmem>>, vector<1x1x1xf32>,
      %cst_43 = arith.constant 0.000000e+00 : f32
      %61 = vector.broadcast %cst_43 : f32 to vector<1x4x1xf32>
      %c0_44 = arith.constant 0 : index
      %c0_45 = arith.constant 0 : index
      %c0_46 = arith.constant 0 : index
      %62 = vector.load %arg5[%c0_44, %c0_45, %c0_46] : memref<1x4x1xf32, #tpu.memory_space<vmem>>, vector<1x4x1xf32>
      tpu.vector_store %arg5[%c0_44, %c0_45, %c0_46], %61 {strides = array<i32>} : memref<1x4x1xf32, #tpu.memory_space<vmem>>, vector<1x4x1xf32>,
      %cst_47 = arith.constant 0.000000e+00 : f32
      %63 = vector.broadcast %cst_47 : f32 to vector<1x4x1xf32>
      %c0_48 = arith.constant 0 : index
      %c0_49 = arith.constant 0 : index
      %c0_50 = arith.constant 0 : index
      %64 = vector.load %arg6[%c0_48, %c0_49, %c0_50] : memref<1x4x1xf32, #tpu.memory_space<vmem>>, vector<1x4x1xf32>
      tpu.vector_store %arg6[%c0_48, %c0_49, %c0_50], %63 {strides = array<i32>} : memref<1x4x1xf32, #tpu.memory_space<vmem>>, vector<1x4x1xf32>,
      %cst_51 = arith.constant 0.000000e+00 : f32
      %65 = vector.broadcast %cst_51 : f32 to vector<1x4x1xf32>
      %c0_52 = arith.constant 0 : index
      %c0_53 = arith.constant 0 : index
      %c0_54 = arith.constant 0 : index
      %66 = vector.load %arg7[%c0_52, %c0_53, %c0_54] : memref<1x4x1xf32, #tpu.memory_space<vmem>>, vector<1x4x1xf32>
      tpu.vector_store %arg7[%c0_52, %c0_53, %c0_54], %65 {strides = array<i32>} : memref<1x4x1xf32, #tpu.memory_space<vmem>>, vector<1x4x1xf32>,
    } else {
    }
    %c0 = arith.constant 0 : index
    %c0_1 = arith.constant 0 : index
    %c0_2 = arith.constant 0 : index
    %3 = vector.load %arg2[%c0, %c0_1, %c0_2] : memref<1x4x16xf32, #tpu.memory_space<vmem>>, vector<1x4x16xf32>
    %c0_3 = arith.constant 0 : index
    %c0_4 = arith.constant 0 : index
    %c0_5 = arith.constant 0 : index
    %4 = vector.load %arg3[%c0_3, %c0_4, %c0_5] : memref<1x1x16xi32, #tpu.memory_space<vmem>>, vector<1x1x16xi32>
    %5 = tpu.iota {dimensions = array<i32: 2>} : vector<1x1x16xi32>
    %c16_i32 = arith.constant 16 : i32
    %6 = arith.muli %arg1, %c16_i32 : i32
    %7 = vector.broadcast %6 : i32 to vector<1x1x16xi32>
    %8 = arith.addi %7, %5 : vector<1x1x16xi32>
    %c16_i32_6 = arith.constant 16 : i32
    %9 = vector.broadcast %c16_i32_6 : i32 to vector<1x1x16xi32>
    %10 = arith.cmpi slt, %8, %9 : vector<1x1x16xi32>
    %11 = arith.extui %10 : vector<1x1x16xi1> to vector<1x1x16xi32>
    %12 = arith.sitofp %11 : vector<1x1x16xi32> to vector<1x1x16xf32>
    %cst = arith.constant 0.000000e+00 : f32
    %13 = vector.shape_cast %10 : vector<1x1x16xi1> to vector<1x1x16xi1>
    %14 = vector.broadcast %13 : vector<1x1x16xi1> to vector<1x4x16xi1>
    %15 = vector.broadcast %cst : f32 to vector<1x4x16xf32>
    %16 = arith.select %14, %3, %15 : vector<1x4x16xi1>, vector<1x4x16xf32>
    %17 = tpu.iota {dimensions = array<i32: 1>} : vector<1x4x16xi32>
    %18 = vector.broadcast %4 : vector<1x1x16xi32> to vector<1x4x16xi32>
    %19 = arith.cmpi eq, %17, %18 : vector<1x4x16xi32>
    %20 = vector.broadcast %10 : vector<1x1x16xi1> to vector<1x4x16xi1>
    %21 = arith.andi %19, %20 : vector<1x4x16xi1>
    %cst_7 = arith.constant 0.000000e+00 : f32
    %22 = vector.broadcast %cst_7 : f32 to vector<1x4x16xf32>
    %23 = arith.select %21, %16, %22 : vector<1x4x16xi1>, vector<1x4x16xf32>
    %cst_8 = arith.constant dense<0xFF800000> : vector<1x16xf32>
    %24 = vector.multi_reduction <maximumf>, %16, %cst_8 [1] : vector<1x4x16xf32> to vector<1x16xf32>
    %25 = vector.shape_cast %24 : vector<1x16xf32> to vector<1x1x16xf32>
    %26 = vector.broadcast %25 : vector<1x1x16xf32> to vector<1x4x16xf32>
    %27 = arith.subf %16, %26 : vector<1x4x16xf32>
    %28 = math.exp %27 : vector<1x4x16xf32>
    %cst_9 = arith.constant dense<0.000000e+00> : vector<1x16xf32>
    %29 = vector.multi_reduction <add>, %28, %cst_9 [1] : vector<1x4x16xf32> to vector<1x16xf32>
    %30 = vector.shape_cast %29 : vector<1x16xf32> to vector<1x1x16xf32>
    %31 = math.log %30 : vector<1x1x16xf32>
    %32 = arith.addf %31, %25 : vector<1x1x16xf32>
    %cst_10 = arith.constant dense<0.000000e+00> : vector<1x16xf32>
    %33 = vector.multi_reduction <add>, %23, %cst_10 [1] : vector<1x4x16xf32> to vector<1x16xf32>
    %34 = vector.shape_cast %33 : vector<1x16xf32> to vector<1x1x16xf32>
    %c0_11 = arith.constant 0 : index
    %c0_12 = arith.constant 0 : index
    %c0_13 = arith.constant 0 : index
    %35 = vector.load %arg4[%c0_11, %c0_12, %c0_13] : memref<1x1x1xf32, #tpu.memory_space<vmem>>, vector<1x1x1xf32>
    %36 = arith.subf %32, %34 : vector<1x1x16xf32>
    %37 = arith.mulf %36, %12 : vector<1x1x16xf32>
    %cst_14 = arith.constant dense<0.000000e+00> : vector<1x1xf32>
    %38 = vector.multi_reduction <add>, %37, %cst_14 [2] : vector<1x1x16xf32> to vector<1x1xf32>
    %39 = vector.shape_cast %38 : vector<1x1xf32> to vector<1x1x1xf32>
    %40 = arith.addf %35, %39 : vector<1x1x1xf32>
    %c0_15 = arith.constant 0 : index
    %c0_16 = arith.constant 0 : index
    %c0_17 = arith.constant 0 : index
    %41 = vector.load %arg4[%c0_15, %c0_16, %c0_17] : memref<1x1x1xf32, #tpu.memory_space<vmem>>, vector<1x1x1xf32>
    tpu.vector_store %arg4[%c0_15, %c0_16, %c0_17], %40 {strides = array<i32>} : memref<1x1x1xf32, #tpu.memory_space<vmem>>, vector<1x1x1xf32>,
    %c0_18 = arith.constant 0 : index
    %c0_19 = arith.constant 0 : index
    %c0_20 = arith.constant 0 : index
    %42 = vector.load %arg5[%c0_18, %c0_19, %c0_20] : memref<1x4x1xf32, #tpu.memory_space<vmem>>, vector<1x4x1xf32>
    %cst_21 = arith.constant dense<0.000000e+00> : vector<1x4xf32>
    %43 = vector.multi_reduction <add>, %23, %cst_21 [2] : vector<1x4x16xf32> to vector<1x4xf32>
    %44 = vector.shape_cast %43 : vector<1x4xf32> to vector<1x4x1xf32>
    %45 = arith.addf %42, %44 : vector<1x4x1xf32>
    %c0_22 = arith.constant 0 : index
    %c0_23 = arith.constant 0 : index
    %c0_24 = arith.constant 0 : index
    %46 = vector.load %arg5[%c0_22, %c0_23, %c0_24] : memref<1x4x1xf32, #tpu.memory_space<vmem>>, vector<1x4x1xf32>
    tpu.vector_store %arg5[%c0_22, %c0_23, %c0_24], %45 {strides = array<i32>} : memref<1x4x1xf32, #tpu.memory_space<vmem>>, vector<1x4x1xf32>,
    %c0_25 = arith.constant 0 : index
    %c0_26 = arith.constant 0 : index
    %c0_27 = arith.constant 0 : index
    %47 = vector.load %arg6[%c0_25, %c0_26, %c0_27] : memref<1x4x1xf32, #tpu.memory_space<vmem>>, vector<1x4x1xf32>
    %cst_28 = arith.constant dense<0.000000e+00> : vector<1x4xf32>
    %48 = vector.multi_reduction <add>, %16, %cst_28 [2] : vector<1x4x16xf32> to vector<1x4xf32>
    %49 = vector.shape_cast %48 : vector<1x4xf32> to vector<1x4x1xf32>
    %50 = arith.addf %47, %49 : vector<1x4x1xf32>
    %c0_29 = arith.constant 0 : index
    %c0_30 = arith.constant 0 : index
    %c0_31 = arith.constant 0 : index
    %51 = vector.load %arg6[%c0_29, %c0_30, %c0_31] : memref<1x4x1xf32, #tpu.memory_space<vmem>>, vector<1x4x1xf32>
    tpu.vector_store %arg6[%c0_29, %c0_30, %c0_31], %50 {strides = array<i32>} : memref<1x4x1xf32, #tpu.memory_space<vmem>>, vector<1x4x1xf32>,
    %c0_32 = arith.constant 0 : index
    %c0_33 = arith.constant 0 : index
    %c0_34 = arith.constant 0 : index
    %52 = vector.load %arg7[%c0_32, %c0_33, %c0_34] : memref<1x4x1xf32, #tpu.memory_space<vmem>>, vector<1x4x1xf32>
    %53 = arith.extui %21 : vector<1x4x16xi1> to vector<1x4x16xi32>
    %54 = arith.sitofp %53 : vector<1x4x16xi32> to vector<1x4x16xf32>
    %cst_35 = arith.constant dense<0.000000e+00> : vector<1x4xf32>
    %55 = vector.multi_reduction <add>, %54, %cst_35 [2] : vector<1x4x16xf32> to vector<1x4xf32>
    %56 = vector.shape_cast %55 : vector<1x4xf32> to vector<1x4x1xf32>
    %57 = arith.addf %52, %56 : vector<1x4x1xf32>
    %c0_36 = arith.constant 0 : index
    %c0_37 = arith.constant 0 : index
    %c0_38 = arith.constant 0 : index
    %58 = vector.load %arg7[%c0_36, %c0_37, %c0_38] : memref<1x4x1xf32, #tpu.memory_space<vmem>>, vector<1x4x1xf32>
    tpu.vector_store %arg7[%c0_36, %c0_37, %c0_38], %57 {strides = array<i32>} : memref<1x4x1xf32, #tpu.memory_space<vmem>>, vector<1x4x1xf32>,
    return
  }
  func.func @transform_0(%arg0: i32, %arg1: i32) -> (i32, i32, i32) {
    %c0_i32 = arith.constant 0 : i32
    %c0_i32_0 = arith.constant 0 : i32
    return %arg0, %c0_i32, %arg1 : i32, i32, i32
  }
  func.func @transform_1(%arg0: i32, %arg1: i32) -> (i32, i32, i32) {
    %c0_i32 = arith.constant 0 : i32
    %c0_i32_0 = arith.constant 0 : i32
    return %arg0, %c0_i32, %arg1 : i32, i32, i32
  }
  func.func @transform_2(%arg0: i32, %arg1: i32) -> (i32, i32, i32) {
    %c0_i32 = arith.constant 0 : i32
    %c0_i32_0 = arith.constant 0 : i32
    %c0_i32_1 = arith.constant 0 : i32
    return %arg0, %c0_i32, %c0_i32_0 : i32, i32, i32
  }
  func.func @transform_3(%arg0: i32, %arg1: i32) -> (i32, i32, i32) {
    %c0_i32 = arith.constant 0 : i32
    %c0_i32_0 = arith.constant 0 : i32
    %c0_i32_1 = arith.constant 0 : i32
    return %arg0, %c0_i32, %c0_i32_0 : i32, i32, i32
  }
  func.func @transform_4(%arg0: i32, %arg1: i32) -> (i32, i32, i32) {
    %c0_i32 = arith.constant 0 : i32
    %c0_i32_0 = arith.constant 0 : i32
    %c0_i32_1 = arith.constant 0 : i32
    return %arg0, %c0_i32, %c0_i32_0 : i32, i32, i32
  }
  func.func @transform_5(%arg0: i32, %arg1: i32) -> (i32, i32, i32) {
    %c0_i32 = arith.constant 0 : i32
    %c0_i32_0 = arith.constant 0 : i32
    %c0_i32_1 = arith.constant 0 : i32
    return %arg0, %c0_i32, %c0_i32_0 : i32, i32, i32
  }
}

</mosaic_0001>

<llo_original>
// kernel: tpu_custom_call.1
$region0: #{tpu_custom_call.1}
  #allocation0 [shape = 'u32[]', space=smem, size = 0x4, offset = 0x4, fixed_abs, tag = 'smem constant byte address 0x4 - core index']
  #allocation1 [shape = 'u32[144,128]{1,0:T(1,128)}', space=vmem, size = 0x12000, scoped, tag = 'internal scratch']
  %s0 = inlined_call_operand.hbm [shape: f32[2,4,16], index: 0, kind: input, shape index: {}]
  %s1 = inlined_call_operand.vmem [shape: s32[2,1,16], index: 1, kind: input, shape index: {}]
  %s2 = inlined_call_operand.vmem [shape: f32[2,1,1], index: 2, kind: output, shape index: {0}]
  %s3 = inlined_call_operand.vmem [shape: f32[2,4,1], index: 3, kind: output, shape index: {1}]
  %s4 = inlined_call_operand.vmem [shape: f32[2,4,1], index: 4, kind: output, shape index: {2}]
  %s5 = inlined_call_operand.vmem [shape: f32[2,4,1], index: 5, kind: output, shape index: {3}]
  %6 = xla_tuple %s2, %s3, %s4, %s5
  %s7 = sld [smem:[#allocation0]]
  $region73: #{tpu_custom_call.1} parent=0
    _
  %s9 = ssub.s32 1, %s7
  %s10 = scalar_select 0, %s9, %s7
  $region1: #{tpu_custom_call.1} parent=0
    #allocation2 [shape = 'u8[4096]{0}', space=vmem, size = 0x1000, scoped, tag = 'input window, operand 0']
    #allocation3 [shape = 's32[2]{0}', space=sflag, size = 0x8, scoped, tag = 'scoped memory for tpu_custom_call.1']
    %11 = vsyncpa [#allocation3], 0
    %s12 = scalar_lea.sflag [#allocation3], 1
    %13 = vsyncpa %s12, 0
    loop: start=0, step=1, limit=4
    $region2: #{tpu_custom_call.1} parent=1 // loop_pre_header
      _
    $region3: #{tpu_custom_call.1} parent=1 // loop_header
      %s15 = sphi 0, %s19
      %p16 = scmp.ge.s32.totalorder %s15, 4
      %s22 = sphi 0, %s34
      %s23 = sphi 0, %s30
      %s24 = sphi 0, %s22
      %s25 = sphi 0, %s23
      %s26 = sphi 0, %s24
      %s27 = sphi 0, %s25
      %s39 = sphi 0, %s41
      %s42 = sphi 0, %s39
      %s43 = sphi 0, %s42
      %s59 = sphi 0, %s43
      %s67 = sphi 0, %s69
      %s70 = sphi 0, %s67
      %s71 = sphi 0, %s70
      %s87 = sphi 0, %s71
      %s93 = sphi 0, %s95
      %s96 = sphi 0, %s93
      %s97 = sphi 0, %s96
      %s113 = sphi 0, %s97
      %s119 = sphi 0, %s121
      %s122 = sphi 0, %s119
      %s123 = sphi 0, %s122
      %s139 = sphi 0, %s123
      %s145 = sphi 0, %s147
      %s148 = sphi 0, %s145
      %s149 = sphi 0, %s148
      %s165 = sphi 0, %s149
      %s171 = sphi 0, %s173
      %s174 = sphi 0, %s171
      %s175 = sphi 0, %s174
      %s191 = sphi 0, %s175
    $region4: #{tpu_custom_call.1} parent=1 // loop_header_branch
      %18 = sbr.rel (%p16) target = $region8
    $region5: #{tpu_custom_call.1} parent=1 // loop_body
      %s20 = ssub.s32 %s15, 1
      %s21 = ssub.s32 %s15, 2
      %s28 = sadd.s32 1, %s23
      %p29 = scmp.ge.s32.totalorder %s28, 1
      %s30 = scalar_select %p29, 0, %s28
      %s31 = sadd.s32 1, %s22
      %s32 = scalar_select %p29, %s31, %s22
      %p33 = scmp.ge.s32.totalorder %s32, 2
      %s34 = scalar_select %p33, 0, %s32
      %s35 = ssub.s32 %s22, %s34
      %s36 = ssub.s32 %s23, %s30
      %s37 = sor.u32 %s35, %s36
      %p38 = scmp.eq.s32.totalorder %s37, 0
      %s40 = sadd.s32 %s39, 1
      %s41 = scalar_select %p38, %s39, %s40
      %p44 = pneg %p38
      %p45 = scmp.eq.s32.totalorder %s15, 1
      %p46 = por %p44, %p45
      %p47 = scmp.ne.s32.totalorder %s39, %s42
      %p48 = scmp.eq.s32.totalorder %s15, 0
      %p49 = por %p47, %p48
      %p50 = scmp.ne.s32.totalorder %s39, %s42
      %p51 = scmp.eq.s32.totalorder %s20, 1
      %p52 = por %p50, %p51
      %p53 = scmp.ne.s32.totalorder %s42, %s43
      %p54 = scmp.eq.s32.totalorder %s20, 0
      %p55 = por %p53, %p54
      %p56 = scmp.ne.s32.totalorder %s42, %s43
      %p57 = scmp.eq.s32.totalorder %s21, 1
      %p58 = por %p56, %p57
      %p60 = scmp.ne.s32.totalorder %s43, %s59
      %p61 = scmp.eq.s32.totalorder %s21, 0
      %p62 = por %p60, %p61
      %s63 = ssub.s32 %s22, %s34
      %s64 = ssub.s32 %s23, %s30
      %s65 = sor.u32 %s63, %s64
      %p66 = scmp.eq.s32.totalorder %s65, 0
      %s68 = sadd.s32 %s67, 1
      %s69 = scalar_select %p66, %s67, %s68
      %p72 = pneg %p66
      %p73 = scmp.eq.s32.totalorder %s15, 1
      %p74 = por %p72, %p73
      %p75 = scmp.ne.s32.totalorder %s67, %s70
      %p76 = scmp.eq.s32.totalorder %s15, 0
      %p77 = por %p75, %p76
      %p78 = scmp.ne.s32.totalorder %s67, %s70
      %p79 = scmp.eq.s32.totalorder %s20, 1
      %p80 = por %p78, %p79
      %p81 = scmp.ne.s32.totalorder %s70, %s71
      %p82 = scmp.eq.s32.totalorder %s20, 0
      %p83 = por %p81, %p82
      %p84 = scmp.ne.s32.totalorder %s70, %s71
      %p85 = scmp.eq.s32.totalorder %s21, 1
      %p86 = por %p84, %p85
      %p88 = scmp.ne.s32.totalorder %s71, %s87
      %p89 = scmp.eq.s32.totalorder %s21, 0
      %p90 = por %p88, %p89
      %s91 = ssub.s32 %s22, %s34
      %p92 = scmp.eq.s32.totalorder %s91, 0
      %s94 = sadd.s32 %s93, 1
      %s95 = scalar_select %p92, %s93, %s94
      %p98 = pneg %p92
      %p99 = scmp.eq.s32.totalorder %s15, 1
      %p100 = por %p98, %p99
      %p101 = scmp.ne.s32.totalorder %s93, %s96
      %p102 = scmp.eq.s32.totalorder %s15, 0
      %p103 = por %p101, %p102
      %p104 = scmp.ne.s32.totalorder %s93, %s96
      %p105 = scmp.eq.s32.totalorder %s20, 1
      %p106 = por %p104, %p105
      %p107 = scmp.ne.s32.totalorder %s96, %s97
      %p108 = scmp.eq.s32.totalorder %s20, 0
      %p109 = por %p107, %p108
      %p110 = scmp.ne.s32.totalorder %s96, %s97
      %p111 = scmp.eq.s32.totalorder %s21, 1
      %p112 = por %p110, %p111
      %p114 = scmp.ne.s32.totalorder %s97, %s113
      %p115 = scmp.eq.s32.totalorder %s21, 0
      %p116 = por %p114, %p115
      %s117 = ssub.s32 %s22, %s34
      %p118 = scmp.eq.s32.totalorder %s117, 0
      %s120 = sadd.s32 %s119, 1
      %s121 = scalar_select %p118, %s119, %s120
      %p124 = pneg %p118
      %p125 = scmp.eq.s32.totalorder %s15, 1
      %p126 = por %p124, %p125
      %p127 = scmp.ne.s32.totalorder %s119, %s122
      %p128 = scmp.eq.s32.totalorder %s15, 0
      %p129 = por %p127, %p128
      %p130 = scmp.ne.s32.totalorder %s119, %s122
      %p131 = scmp.eq.s32.totalorder %s20, 1
      %p132 = por %p130, %p131
      %p133 = scmp.ne.s32.totalorder %s122, %s123
      %p134 = scmp.eq.s32.totalorder %s20, 0
      %p135 = por %p133, %p134
      %p136 = scmp.ne.s32.totalorder %s122, %s123
      %p137 = scmp.eq.s32.totalorder %s21, 1
      %p138 = por %p136, %p137
      %p140 = scmp.ne.s32.totalorder %s123, %s139
      %p141 = scmp.eq.s32.totalorder %s21, 0
      %p142 = por %p140, %p141
      %s143 = ssub.s32 %s22, %s34
      %p144 = scmp.eq.s32.totalorder %s143, 0
      %s146 = sadd.s32 %s145, 1
      %s147 = scalar_select %p144, %s145, %s146
      %p150 = pneg %p144
      %p151 = scmp.eq.s32.totalorder %s15, 1
      %p152 = por %p150, %p151
      %p153 = scmp.ne.s32.totalorder %s145, %s148
      %p154 = scmp.eq.s32.totalorder %s15, 0
      %p155 = por %p153, %p154
      %p156 = scmp.ne.s32.totalorder %s145, %s148
      %p157 = scmp.eq.s32.totalorder %s20, 1
      %p158 = por %p156, %p157
      %p159 = scmp.ne.s32.totalorder %s148, %s149
      %p160 = scmp.eq.s32.totalorder %s20, 0
      %p161 = por %p159, %p160
      %p162 = scmp.ne.s32.totalorder %s148, %s149
      %p163 = scmp.eq.s32.totalorder %s21, 1
      %p164 = por %p162, %p163
      %p166 = scmp.ne.s32.totalorder %s149, %s165
      %p167 = scmp.eq.s32.totalorder %s21, 0
      %p168 = por %p166, %p167
      %s169 = ssub.s32 %s22, %s34
      %p170 = scmp.eq.s32.totalorder %s169, 0
      %s172 = sadd.s32 %s171, 1
      %s173 = scalar_select %p170, %s171, %s172
      %p176 = pneg %p170
      %p177 = scmp.eq.s32.totalorder %s15, 1
      %p178 = por %p176, %p177
      %p179 = scmp.ne.s32.totalorder %s171, %s174
      %p180 = scmp.eq.s32.totalorder %s15, 0
      %p181 = por %p179, %p180
      %p182 = scmp.ne.s32.totalorder %s171, %s174
      %p183 = scmp.eq.s32.totalorder %s20, 1
      %p184 = por %p182, %p183
      %p185 = scmp.ne.s32.totalorder %s174, %s175
      %p186 = scmp.eq.s32.totalorder %s20, 0
      %p187 = por %p185, %p186
      %p188 = scmp.ne.s32.totalorder %s174, %s175
      %p189 = scmp.eq.s32.totalorder %s21, 1
      %p190 = por %p188, %p189
      %p192 = scmp.ne.s32.totalorder %s175, %s191
      %p193 = scmp.eq.s32.totalorder %s21, 0
      %p194 = por %p192, %p193
      %p195 = scmp.le.s32.totalorder 1, %s15
      %p196 = scmp.lt.s32.totalorder %s15, 3
      %p197 = pnand %p195, %p196
      %p198 = pneg %p197
      // Predicated region
      $region9: #{tpu_custom_call.1} parent=5 // pred_check
        _
      $region10: #{tpu_custom_call.1} parent=5 // pred_check_branch
        %200 = sbr.rel (%p197) target = $region12
      $region11: #{tpu_custom_call.1} parent=5 // pred_region
        %s201 = ssub.s32 %s15, 1
      $region12: #{tpu_custom_call.1} parent=5 // pred_fallthru
        _
      %p202 = scmp.lt.s32.totalorder %s15, 2
      // Predicated region
      $region13: #{tpu_custom_call.1} parent=5 // pred_check
        %p203 = pneg %p202
      $region14: #{tpu_custom_call.1} parent=5 // pred_check_branch
        %205 = sbr.rel (%p203) target = $region16
      $region15: #{tpu_custom_call.1} parent=5 // pred_region
        // Predicated region
        $region17: #{tpu_custom_call.1} parent=15 // pred_check
          %p206 = pneg %p49
        $region18: #{tpu_custom_call.1} parent=15 // pred_check_branch
          %208 = sbr.rel (%p206) target = $region20
        $region19: #{tpu_custom_call.1} parent=15 // pred_region
          %s209 = sand.u32 %s39, 1
          %s210 = scalar_lea.sflag [#allocation3], %s209
          %s211 = sand.u32 %s39, 1
          %s212 = smul.addr %s211, 4
          %s213 = scalar_lea.vmem [#allocation2], %s212
          %s215 = ssub.s32 64, 64
          %216 = vsyncadd %s210, %s215
          %s217 = sadd.s32 %s23, %s22
          %s218 = smul.addr %s217, 64
          %s219 = scalar_lea.hbm %s0, %s218
          %s221 = sshll.u32 %s213, 4
          %s222 = int_to_ptr.vmem [resolvable:$true] %s221
          %224 = dma.hbm_to_vmem [thread:$0]  %s219, 64, %s222, %s210
        $region20: #{tpu_custom_call.1} parent=15 // pred_fallthru
          _
        // Predicated region
        $region21: #{tpu_custom_call.1} parent=15 // pred_check
          %p225 = pneg %p77
        $region22: #{tpu_custom_call.1} parent=15 // pred_check_branch
          %227 = sbr.rel (%p225) target = $region24
        $region23: #{tpu_custom_call.1} parent=15 // pred_region
          %p228 = scmp.lt.s32.totalorder %s22, 1
          %s229 = scalar_select %p228, %s22, 1
          %p230 = scmp.lt.s32.totalorder %s23, 0
          %s231 = scalar_select %p230, %s23, 0
          %s232 = sadd.s32 %s231, %s229
          %s233 = scalar_lea.vmem %s1, %s232
        $region24: #{tpu_custom_call.1} parent=15 // pred_fallthru
          _
      $region16: #{tpu_custom_call.1} parent=5 // pred_fallthru
        _
      %p234 = scmp.le.s32.totalorder 1, %s15
      %p235 = scmp.lt.s32.totalorder %s15, 3
      %p236 = pnand %p234, %p235
      %p237 = pneg %p236
      // Predicated region
      $region25: #{tpu_custom_call.1} parent=5 // pred_check
        _
      $region26: #{tpu_custom_call.1} parent=5 // pred_check_branch
        %239 = sbr.rel (%p236) target = $region28
      $region27: #{tpu_custom_call.1} parent=5 // pred_region
        %s240 = ssub.s32 %s15, 1
        %s241 = sand.u32 %s42, 1
        %s242 = scalar_lea.sflag [#allocation3], %s241
        %s243 = sand.u32 %s42, 1
        %s244 = smul.addr %s243, 4
        %s245 = scalar_lea.vmem [#allocation2], %s244
        // Predicated region
        $region29: #{tpu_custom_call.1} parent=27 // pred_check
          %p246 = pneg %p55
        $region30: #{tpu_custom_call.1} parent=27 // pred_check_branch
          %248 = sbr.rel (%p246) target = $region32
        $region31: #{tpu_custom_call.1} parent=27 // pred_region
          %249 = dma.done %s242, 64
        $region32: #{tpu_custom_call.1} parent=27 // pred_fallthru
          _
        %s250 = sand.u32 %s42, 1
        %s251 = scalar_lea.sflag [#allocation3], %s250
        %s252 = sand.u32 %s42, 1
        %s253 = smul.addr %s252, 4
        %s254 = scalar_lea.vmem [#allocation2], %s253
        %p255 = pneg %p55
        %p256 = pneg %p52
        %p257 = scmp.lt.s32.totalorder %s24, 1
        %s258 = scalar_select %p257, %s24, 1
        %p259 = scmp.lt.s32.totalorder %s25, 0
        %s260 = scalar_select %p259, %s25, 0
        %s261 = sadd.s32 %s260, %s258
        %s262 = scalar_lea.vmem %s1, %s261
        %p263 = pneg %p83
        %p264 = pneg %p80
        %p265 = pneg %p109
        %p266 = pneg %p106
        %p267 = scmp.lt.s32.totalorder %s24, 1
        %s268 = scalar_select %p267, %s24, 1
        %s269 = scalar_lea.vmem %s2, %s268
        %p270 = pneg %p135
        %p271 = pneg %p132
        %p272 = scmp.lt.s32.totalorder %s24, 1
        %s273 = scalar_select %p272, %s24, 1
        %s274 = smul.addr %s273, 4
        %s275 = scalar_lea.vmem %s3, %s274
        %p276 = pneg %p161
        %p277 = pneg %p158
        %p278 = scmp.lt.s32.totalorder %s24, 1
        %s279 = scalar_select %p278, %s24, 1
        %s280 = smul.addr %s279, 4
        %s281 = scalar_lea.vmem %s4, %s280
        %p282 = pneg %p187
        %p283 = pneg %p184
        %p284 = scmp.lt.s32.totalorder %s24, 1
        %s285 = scalar_select %p284, %s24, 1
        %s286 = smul.addr %s285, 4
        %s287 = scalar_lea.vmem %s5, %s286
        %p288 = scmp.lt.s32.totalorder %s24, 1
        %s289 = scalar_select %p288, %s24, 1
        %p290 = scmp.lt.s32.totalorder %s25, 0
        %s291 = scalar_select %p290, %s25, 0
        %s292 = sadd.s32 %s291, %s289
        %s293 = scalar_lea.vmem %s1, %s292
        %p294 = scmp.lt.s32.totalorder %s24, 1
        %s295 = scalar_select %p294, %s24, 1
        %s296 = scalar_lea.vmem %s2, %s295
        %p297 = scmp.lt.s32.totalorder %s24, 1
        %s298 = scalar_select %p297, %s24, 1
        %s299 = smul.addr %s298, 4
        %s300 = scalar_lea.vmem %s3, %s299
        %p301 = scmp.lt.s32.totalorder %s24, 1
        %s302 = scalar_select %p301, %s24, 1
        %s303 = smul.addr %s302, 4
        %s304 = scalar_lea.vmem %s4, %s303
        %p305 = scmp.lt.s32.totalorder %s24, 1
        %s306 = scalar_select %p305, %s24, 1
        %s307 = smul.addr %s306, 4
        %s308 = scalar_lea.vmem %s5, %s307
        %p309 = scmp.eq.s32.totalorder %s25, 0
        // Predicated region
        $region33: #{tpu_custom_call.1} parent=27 // pred_check
          %p310 = pneg %p309
        $region34: #{tpu_custom_call.1} parent=27 // pred_check_branch
          %312 = sbr.rel (%p310) target = $region36
        $region35: #{tpu_custom_call.1} parent=27 // pred_region
          %vm313 = vcmask 0
          %314 = vst.msk [vmem:[%s296] sm:$0x1] %vm313, 0.0
          %vm315 = vcmask 3072
          %316 = vst.msk [vmem:[%s300] sm:$0xf] %vm315, 0.0
          %317 = vst.msk [vmem:[%s304] sm:$0xf] %vm315, 0.0
          %318 = vst.msk [vmem:[%s308] sm:$0xf] %vm315, 0.0
        $region36: #{tpu_custom_call.1} parent=27 // pred_fallthru
          _
        %v319 = vld [vmem:[%s245] sm:$0xf]
        %v320 = vld [vmem:[%s293] sm:$0x1]
        %v321 = vlaneseq
        %v322 = vand.u32 %v321, 127
        %s323 = smul.u32 %s25, 16
        %v324 = vstv %s323
        %v325 = vadd.s32 %v324, %v322
        %vm326 = vcmp.lt.s32.totalorder %v325, 16
        %v327 = vsel %vm326, 1, 0
        %v328 = vcvt.s32.f32 %v327
        %vm329 = vcmp.eq.s32.totalorder %v327, 1
        %v330 = vsel %vm329, %v319, 0.0
        %v331 = vlaneseq
        %v332 = vshrl.u32 %v331, 7
        %v333 = vlaneseq
        %v334 = vshrl.u32 %v333, 7
        %v335 = vsub.s32 0, %v334
        %v336 = vrot.slane %v320, %v335
        %vm337 = vcmp.eq.s32.totalorder %v332, %v336
        %vm338 = vmand %vm337, %vm329
        %v339 = vsel %vm338, %v330, 0.0
        %vm340 = vcmask 125952
        %v341 = vsel %vm340, %v330, -inf
        %v342 = vrot.slane %v341, 4
        %v343 = vmax.f32 %v341, %v342
        %v344 = vrot.slane %v343, 2
        %v345 = vmax.f32 %v343, %v344
        %v346 = vrot.slane %v345, 1
        %v347 = vmax.f32 %v345, %v346
        %v348 = vsub.f32 %v330, %v347
        %v349 = vmul.f32 %v348, 1.442695
        %v350 = vpow.pop %v349
        %v351 = vsel %vm340, %v350, 0.0
        %v352 = vrot.slane %v351, 4
        %v353 = vadd.f32 %v351, %v352
        %v354 = vrot.slane %v353, 2
        %v355 = vadd.f32 %v353, %v354
        %v356 = vrot.slane %v355, 1
        %v357 = vadd.f32 %v355, %v356
        %v358 = vlog2.pop %v357
        %v359 = vmul.f32 %v358, 0.6931472
        %v360 = vadd.f32 %v359, %v347
        %v361 = vsel %vm340, %v339, 0.0
        %v362 = vrot.slane %v361, 4
        %v363 = vadd.f32 %v361, %v362
        %v364 = vrot.slane %v363, 2
        %v365 = vadd.f32 %v363, %v364
        %v366 = vrot.slane %v365, 1
        %v367 = vadd.f32 %v365, %v366
        %v368 = vld [vmem:[%s296] sm:$0x1]
        %v369 = vsub.f32 %v360, %v367
        %v370 = vmul.f32 %v369, %v328
        %vm371 = vcmask 130048
        %v372 = vsel %vm371, %v370, 0.0
        %373 = vadd.xlane.f32.xlu0 %v372
        %v374 = vpop.xlane.xlu0 %373
        %v375 = vadd.f32 %v368, %v374
        %vm376 = vcmask 0
        %377 = vst.msk [vmem:[%s296] sm:$0x1] %vm376, %v375
        %v378 = vld [vmem:[%s300] sm:$0xf]
        %379 = vadd.xlane.f32.xlu0 %v361
        %v380 = vpop.xlane.xlu0 %379
        %v381 = vadd.f32 %v378, %v380
        %vm382 = vcmask 3072
        %383 = vst.msk [vmem:[%s300] sm:$0xf] %vm382, %v381
        %v384 = vld [vmem:[%s304] sm:$0xf]
        %v385 = vsel %vm340, %v330, 0.0
        %386 = vadd.xlane.f32.xlu0 %v385
        %v387 = vpop.xlane.xlu0 %386
        %v388 = vadd.f32 %v384, %v387
        %389 = vst.msk [vmem:[%s304] sm:$0xf] %vm382, %v388
        %v390 = vld [vmem:[%s308] sm:$0xf]
        %v391 = vsel %vm338, 1, 0
        %v392 = vcvt.s32.f32 %v391
        %v393 = vsel %vm340, %v392, 0.0
        %394 = vadd.xlane.f32.xlu0 %v393
        %v395 = vpop.xlane.xlu0 %394
        %v396 = vadd.f32 %v390, %v395
        %397 = vst.msk [vmem:[%s308] sm:$0xf] %vm382, %v396
        %p398 = scmp.lt.s32.totalorder %s24, 1
        %s399 = scalar_select %p398, %s24, 1
        %s400 = scalar_lea.vmem %s2, %s399
        %p401 = scmp.lt.s32.totalorder %s24, 1
        %s402 = scalar_select %p401, %s24, 1
        %s403 = smul.addr %s402, 4
        %s404 = scalar_lea.vmem %s3, %s403
        %p405 = scmp.lt.s32.totalorder %s24, 1
        %s406 = scalar_select %p405, %s24, 1
        %s407 = smul.addr %s406, 4
        %s408 = scalar_lea.vmem %s4, %s407
        %p409 = scmp.lt.s32.totalorder %s24, 1
        %s410 = scalar_select %p409, %s24, 1
        %s411 = smul.addr %s410, 4
        %s412 = scalar_lea.vmem %s5, %s411
        // Predicated region
        $region37: #{tpu_custom_call.1} parent=27 // pred_check
          %p413 = pneg %p106
        $region38: #{tpu_custom_call.1} parent=27 // pred_check_branch
          %415 = sbr.rel (%p413) target = $region40
        $region39: #{tpu_custom_call.1} parent=27 // pred_region
          _
        $region40: #{tpu_custom_call.1} parent=27 // pred_fallthru
          _
        // Predicated region
        $region41: #{tpu_custom_call.1} parent=27 // pred_check
          %p416 = pneg %p132
        $region42: #{tpu_custom_call.1} parent=27 // pred_check_branch
          %418 = sbr.rel (%p416) target = $region44
        $region43: #{tpu_custom_call.1} parent=27 // pred_region
          _
        $region44: #{tpu_custom_call.1} parent=27 // pred_fallthru
          _
        // Predicated region
        $region45: #{tpu_custom_call.1} parent=27 // pred_check
          %p419 = pneg %p158
        $region46: #{tpu_custom_call.1} parent=27 // pred_check_branch
          %421 = sbr.rel (%p419) target = $region48
        $region47: #{tpu_custom_call.1} parent=27 // pred_region
          _
        $region48: #{tpu_custom_call.1} parent=27 // pred_fallthru
          _
        // Predicated region
        $region49: #{tpu_custom_call.1} parent=27 // pred_check
          %p422 = pneg %p184
        $region50: #{tpu_custom_call.1} parent=27 // pred_check_branch
          %424 = sbr.rel (%p422) target = $region52
        $region51: #{tpu_custom_call.1} parent=27 // pred_region
          _
        $region52: #{tpu_custom_call.1} parent=27 // pred_fallthru
          _
      $region28: #{tpu_custom_call.1} parent=5 // pred_fallthru
        _
      %p425 = scmp.le.s32.totalorder 2, %s15
      // Predicated region
      $region53: #{tpu_custom_call.1} parent=5 // pred_check
        %p426 = pneg %p425
      $region54: #{tpu_custom_call.1} parent=5 // pred_check_branch
        %428 = sbr.rel (%p426) target = $region56
      $region55: #{tpu_custom_call.1} parent=5 // pred_region
        %s429 = ssub.s32 %s15, 2
        // Predicated region
        $region57: #{tpu_custom_call.1} parent=55 // pred_check
          %p430 = pneg %p112
        $region58: #{tpu_custom_call.1} parent=55 // pred_check_branch
          %432 = sbr.rel (%p430) target = $region60
        $region59: #{tpu_custom_call.1} parent=55 // pred_region
          %p433 = scmp.lt.s32.totalorder %s26, 1
          %s434 = scalar_select %p433, %s26, 1
          %s435 = scalar_lea.vmem %s2, %s434
        $region60: #{tpu_custom_call.1} parent=55 // pred_fallthru
          _
        // Predicated region
        $region61: #{tpu_custom_call.1} parent=55 // pred_check
          %p436 = pneg %p138
        $region62: #{tpu_custom_call.1} parent=55 // pred_check_branch
          %438 = sbr.rel (%p436) target = $region64
        $region63: #{tpu_custom_call.1} parent=55 // pred_region
          %p439 = scmp.lt.s32.totalorder %s26, 1
          %s440 = scalar_select %p439, %s26, 1
          %s441 = smul.addr %s440, 4
          %s442 = scalar_lea.vmem %s3, %s441
        $region64: #{tpu_custom_call.1} parent=55 // pred_fallthru
          _
        // Predicated region
        $region65: #{tpu_custom_call.1} parent=55 // pred_check
          %p443 = pneg %p164
        $region66: #{tpu_custom_call.1} parent=55 // pred_check_branch
          %445 = sbr.rel (%p443) target = $region68
        $region67: #{tpu_custom_call.1} parent=55 // pred_region
          %p446 = scmp.lt.s32.totalorder %s26, 1
          %s447 = scalar_select %p446, %s26, 1
          %s448 = smul.addr %s447, 4
          %s449 = scalar_lea.vmem %s4, %s448
        $region68: #{tpu_custom_call.1} parent=55 // pred_fallthru
          _
        // Predicated region
        $region69: #{tpu_custom_call.1} parent=55 // pred_check
          %p450 = pneg %p190
        $region70: #{tpu_custom_call.1} parent=55 // pred_check_branch
          %452 = sbr.rel (%p450) target = $region72
        $region71: #{tpu_custom_call.1} parent=55 // pred_region
          %p453 = scmp.lt.s32.totalorder %s26, 1
          %s454 = scalar_select %p453, %s26, 1
          %s455 = smul.addr %s454, 4
          %s456 = scalar_lea.vmem %s5, %s455
        $region72: #{tpu_custom_call.1} parent=55 // pred_fallthru
          _
      $region56: #{tpu_custom_call.1} parent=5 // pred_fallthru
        _
    $region6: #{tpu_custom_call.1} parent=1 // loop_footer
      %s19 = sadd.s32 1, %s15
    $region7: #{tpu_custom_call.1} parent=1 // loop_footer_branch
      %14 = sbr.rel target = $region3
    $region8: #{tpu_custom_call.1} parent=1 // loop_exit
      _
    %457 = vsyncpa [#allocation3], 1
    %s458 = scalar_lea.sflag [#allocation3], 1
    %459 = vsyncpa %s458, 1

</llo_original>
